<compile_context>
chip_gen: v7x
topology: tpu7x:2x2x1
jax: 0.10.0
libtpu: 0.0.40
codegen_flags: <defaults>
</compile_context>

<pallas_src>
import jax
import jax.numpy as jnp
from jax.experimental import pallas as pl
from jax.experimental.pallas import tpu as pltpu

EPS = 1e-10


def _round_up(x, m):
    return (x + m - 1) // m * m


def _pick_tile(hw, cap=2048):
    """Spatial tile width: full HW if small, else a 128-multiple cap.

    For real VGG-like channel counts on v7x (64 MiB VMEM) shrink `cap`; at the
    toy channel counts here the footprint is tiny on every generation.
    """
    if hw <= cap:
        return hw                    # block dim == full array dim -> always legal
    return cap                       # multiple of 128


# ---------------------------------------------------------------------------
# Fused forward kernel: all layers for one (image, HW-tile) per grid step.
# ---------------------------------------------------------------------------
def _make_fused_kernel(n_layers, cin0, target_layers, target_couts):
    target_index = {t: k for k, t in enumerate(target_layers)}

    def kernel(x_ref, w_ref, b_ref, *out_refs):
        # x_ref:  (1, cin0, THW)      unpadded input tile
        # w_ref:  (L, Cmax, Cmax)     zero-padded packed weights (z_score folded in)
        # b_ref:  (L, Cmax, 1)        zero-padded packed biases
        h = x_ref[0].astype(jnp.float32)                       # (cin0, THW)
        for li in range(n_layers):                              # static unrolled
            w = w_ref[li]                                       # (Cmax, Cmax)
            if li == 0:
                w = w[:, :cin0]                                 # (Cmax, cin0) static slice
            b = b_ref[li]                                       # (Cmax, 1)
            # 1x1 conv == channel matmul; HW stays lane-dense on the last dim.
            h = jnp.dot(w, h, preferred_element_type=jnp.float32) + b
            h = jnp.maximum(h, 0.0)                             # padded rows stay 0
            if (li + 1) in target_index:
                k = target_index[li + 1]
                # normalize_activation fused: x / (sqrt(sum_c x^2) + eps).
                # Padded channel rows are exactly 0 -> norm is exact.
                norm = jnp.sqrt(jnp.sum(h * h, axis=0, keepdims=True))   # (1, THW)
                inv = pl.reciprocal(norm + EPS)                 # exact divide
                co = target_couts[k]
                out_refs[k][0] = (h[:co] * inv).astype(out_refs[k].dtype)

    return kernel


# ---------------------------------------------------------------------------
# BaseNet forward (single fused Pallas kernel)
# ---------------------------------------------------------------------------
class BaseNetPallas:
    def __init__(self, key, channels=(3, 8, 16, 16), target_layers=(2, 3)):
        # registered buffers from BaseNet.__init__ ([1, 3, 1, 1] in torch)
        self.mean = jnp.array([-0.03, -0.088, -0.188], jnp.float32)
        self.std = jnp.array([0.458, 0.448, 0.45], jnp.float32)
        self.channels = tuple(channels)
        self.target_layers = tuple(sorted(target_layers))
        n_convs = len(channels) - 1
        assert all(1 <= t <= n_convs for t in self.target_layers), \
            "every target layer must exist (otherwise outputs would be unwritten)"

        # deterministic synthetic layer parameters (1x1 conv + ReLU per layer)
        self.params = []
        for cin, cout in zip(channels[:-1], channels[1:]):
            key, wk, bk = jax.random.split(key, 3)
            w = 0.2 * jax.random.normal(wk, (cout, cin), jnp.float32)
            b = 0.1 * jax.random.normal(bk, (cout, 1), jnp.float32)
            self.params.append((w, b))

        # --- static early-break: how many layers actually execute ---
        layers_used, collected = 0, 0
        for i in range(1, len(self.params) + 1):
            layers_used = i
            if i in self.target_layers:
                collected += 1
            if collected == len(self.target_layers):
                break
        self.layers_used = layers_used
        self.target_couts = tuple(self.params[t - 1][0].shape[0]
                                  for t in self.target_layers)

        # --- fold z_score into layer 1:  W1' = W1*diag(1/std), b1' = b1 - W1@(mean/std)
        w1, b1 = self.params[0]
        inv_std = 1.0 / self.std
        w1_fold = w1 * inv_std[None, :]
        b1_fold = b1 - (w1 @ (self.mean * inv_std))[:, None]
        folded = [(w1_fold, b1_fold)] + list(self.params[1:layers_used])

        # --- pack all layer params into two stacked zero-padded tensors ---
        self.cmax = _round_up(max(max(w.shape) for w, _ in folded), 8)
        L = layers_used
        w_pack = jnp.zeros((L, self.cmax, self.cmax), jnp.float32)
        b_pack = jnp.zeros((L, self.cmax, 1), jnp.float32)
        for li, (wt, bt) in enumerate(folded):
            co, ci = wt.shape
            w_pack = w_pack.at[li, :co, :ci].set(wt)
            b_pack = b_pack.at[li, :co, :1].set(bt)
        self.w_pack = w_pack
        self.b_pack = b_pack

    def forward(self, x, out_dtype=None):
        # x: (N, C, H, W) NCHW, same convention as PyTorch
        n, c, h, w = x.shape
        assert c == self.channels[0]
        hw = h * w
        thw = _pick_tile(hw)
        out_dtype = x.dtype if out_dtype is None else out_dtype

        # No channel padding, no extra HBM pass: just a metadata reshape.
        x_flat = x.reshape(n, c, hw)

        kernel = _make_fused_kernel(self.layers_used, c,
                                    self.target_layers, self.target_couts)

        grid = (n, pl.cdiv(hw, thw))
        in_specs = [
            pl.BlockSpec((1, c, thw), lambda i, j: (i, 0, j)),
            pl.BlockSpec(self.w_pack.shape, lambda i, j: (0, 0, 0)),  # fetched once
            pl.BlockSpec(self.b_pack.shape, lambda i, j: (0, 0, 0)),  # fetched once
        ]
        out_shape = tuple(jax.ShapeDtypeStruct((n, co, hw), out_dtype)
                          for co in self.target_couts)
        out_specs = tuple(pl.BlockSpec((1, co, thw), lambda i, j: (i, 0, j))
                          for co in self.target_couts)

        # Explicit VMEM budget: 2x-buffered input + outputs + packed params
        # + intermediate activations, with headroom.
        out_isize = jnp.dtype(out_dtype).itemsize
        tile_bytes = (2 * c * thw * x.dtype.itemsize
                      + 2 * sum(co * thw * out_isize for co in self.target_couts)
                      + 2 * (self.w_pack.size + self.b_pack.size) * 4
                      + 4 * self.cmax * thw * 4)
        vmem_limit = int(min(max(2 * tile_bytes, 16 << 20), 64 << 20))

        outs = pl.pallas_call(
            kernel,
            out_shape=out_shape,
            grid=grid,
            in_specs=in_specs,
            out_specs=out_specs,
            compiler_params=pltpu.CompilerParams(
                dimension_semantics=("parallel", "parallel"),
                vmem_limit_bytes=vmem_limit),
        )(x_flat, self.w_pack, self.b_pack)

        return [o.reshape(n, co, h, w) for o, co in zip(outs, self.target_couts)]


# ---------------------------------------------------------------------------
# Pure-JAX reference (un-folded, un-packed) for correctness check
# ---------------------------------------------------------------------------
def ref_forward(net, x):
    n, c, h, w = x.shape
    xz = (x - net.mean.reshape(1, 3, 1, 1)) / net.std.reshape(1, 3, 1, 1)
    xf = xz.reshape(n, c, h * w)
    outs = []
    for i, (wt, bt) in enumerate(net.params, 1):
        xf = jnp.maximum(jnp.einsum("oc,nch->noh", wt, xf) + bt[None], 0.0)
        if i in net.target_layers:
            norm = jnp.sqrt(jnp.sum(xf ** 2, axis=1, keepdims=True))
            outs.append((xf / (norm + EPS)).reshape(n, -1, h, w))
        if len(outs) == len(net.target_layers):
            break
    return outs


if __name__ == "__main__":
    key = jax.random.PRNGKey(0)
    key, xk, pk = jax.random.split(key, 3)
    x = jax.random.normal(xk, (2, 3, 16, 16), jnp.float32)

    net = BaseNetPallas(pk)

    # f32 outputs (tight tolerance vs. pure-JAX reference)
    outs = net.forward(x)
    outs = [jax.block_until_ready(o) for o in outs]
    refs = ref_forward(net, x)
    assert len(outs) == len(refs)
    for o, r in zip(outs, refs):
        assert o.shape == r.shape, (o.shape, r.shape)
        assert jnp.allclose(o, r, rtol=1e-5, atol=1e-5), \
            float(jnp.max(jnp.abs(o - r)))

    # bf16 outputs (halves HBM write traffic on v6e/v7x); math stays f32,
    # only the final store is cast, so a loose tolerance suffices.
    outs_bf16 = net.forward(x, out_dtype=jnp.bfloat16)
    outs_bf16 = [jax.block_until_ready(o) for o in outs_bf16]
    for o, r in zip(outs_bf16, refs):
        assert o.dtype == jnp.bfloat16
        assert jnp.allclose(o.astype(jnp.float32), r, rtol=2e-2, atol=2e-2), \
            float(jnp.max(jnp.abs(o.astype(jnp.float32) - r)))

    print("KERNEL_OK")
</pallas_src>

<mosaic_0001>
module attributes {stable_mosaic.version = 11 : i64} {
  func.func @kernel(%arg0: i32, %arg1: i32, %arg2: memref<1x3x256xf32, #tpu.memory_space<vmem>>, %arg3: memref<3x16x16xf32, #tpu.memory_space<vmem>>, %arg4: memref<3x16x1xf32, #tpu.memory_space<vmem>>, %arg5: memref<1x16x256xf32, #tpu.memory_space<vmem>>, %arg6: memref<1x16x256xf32, #tpu.memory_space<vmem>>) attributes {dimension_semantics = [#tpu.dimension_semantics<parallel>, #tpu.dimension_semantics<parallel>], iteration_bounds = array<i64: 2, 1>, scalar_prefetch = 0 : i64, scratch_operands = 0 : i64, tpu.core_type = #tpu.core_type<tc>, window_params = [{transform_indices = @transform_0, window_bounds = array<i64: 1, 3, 256>}, {pipeline_mode = #tpu.pipeline_mode<synchronous>, transform_indices = @transform_1, window_bounds = array<i64: 3, 16, 16>}, {pipeline_mode = #tpu.pipeline_mode<synchronous>, transform_indices = @transform_2, window_bounds = array<i64: 3, 16, 1>}, {transform_indices = @transform_3, window_bounds = array<i64: 1, 16, 256>}, {transform_indices = @transform_4, window_bounds = array<i64: 1, 16, 256>}]} {
    %c0 = arith.constant 0 : index
    %c0_0 = arith.constant 0 : index
    %c0_1 = arith.constant 0 : index
    %0 = vector.load %arg2[%c0, %c0_0, %c0_1] : memref<1x3x256xf32, #tpu.memory_space<vmem>>, vector<1x3x256xf32>
    %1 = vector.shape_cast %0 : vector<1x3x256xf32> to vector<3x256xf32>
    %c0_2 = arith.constant 0 : index
    %c0_3 = arith.constant 0 : index
    %c0_4 = arith.constant 0 : index
    %2 = vector.load %arg3[%c0_2, %c0_3, %c0_4] : memref<3x16x16xf32, #tpu.memory_space<vmem>>, vector<1x16x16xf32>
    %3 = vector.shape_cast %2 : vector<1x16x16xf32> to vector<16x16xf32>
    %4 = vector.extract_strided_slice %3 {offsets = [0, 0], sizes = [16, 3], strides = [1, 1]} : vector<16x16xf32> to vector<16x3xf32>
    %c0_5 = arith.constant 0 : index
    %c0_6 = arith.constant 0 : index
    %c0_7 = arith.constant 0 : index
    %5 = vector.load %arg4[%c0_5, %c0_6, %c0_7] : memref<3x16x1xf32, #tpu.memory_space<vmem>>, vector<1x16x1xf32>
    %6 = vector.shape_cast %5 : vector<1x16x1xf32> to vector<16x1xf32>
    %cst = arith.constant dense<0.000000e+00> : vector<16x256xf32>
    %7 = tpu.matmul %4, %1, %cst {dimension_numbers = #tpu.dot_dimension_numbers<[1], [0], [0], [1], [0, 0, 1, 1], [], []>} : vector<16x3xf32>, vector<3x256xf32>, vector<16x256xf32> -> vector<16x256xf32>
    %8 = vector.broadcast %6 : vector<16x1xf32> to vector<16x256xf32>
    %9 = arith.addf %7, %8 : vector<16x256xf32>
    %cst_8 = arith.constant 0.000000e+00 : f32
    %10 = vector.broadcast %cst_8 : f32 to vector<16x256xf32>
    %11 = arith.maximumf %9, %10 : vector<16x256xf32>
    %c1 = arith.constant 1 : index
    %c0_9 = arith.constant 0 : index
    %c0_10 = arith.constant 0 : index
    %12 = vector.load %arg3[%c1, %c0_9, %c0_10] : memref<3x16x16xf32, #tpu.memory_space<vmem>>, vector<1x16x16xf32>
    %13 = vector.shape_cast %12 : vector<1x16x16xf32> to vector<16x16xf32>
    %c1_11 = arith.constant 1 : index
    %c0_12 = arith.constant 0 : index
    %c0_13 = arith.constant 0 : index
    %14 = vector.load %arg4[%c1_11, %c0_12, %c0_13] : memref<3x16x1xf32, #tpu.memory_space<vmem>>, vector<1x16x1xf32>
    %15 = vector.shape_cast %14 : vector<1x16x1xf32> to vector<16x1xf32>
    %cst_14 = arith.constant dense<0.000000e+00> : vector<16x256xf32>
    %16 = tpu.matmul %13, %11, %cst_14 {dimension_numbers = #tpu.dot_dimension_numbers<[1], [0], [0], [1], [0, 0, 1, 1], [], []>} : vector<16x16xf32>, vector<16x256xf32>, vector<16x256xf32> -> vector<16x256xf32>
    %17 = vector.broadcast %15 : vector<16x1xf32> to vector<16x256xf32>
    %18 = arith.addf %16, %17 : vector<16x256xf32>
    %cst_15 = arith.constant 0.000000e+00 : f32
    %19 = vector.broadcast %cst_15 : f32 to vector<16x256xf32>
    %20 = arith.maximumf %18, %19 : vector<16x256xf32>
    %21 = arith.mulf %20, %20 : vector<16x256xf32>
    %cst_16 = arith.constant dense<0.000000e+00> : vector<256xf32>
    %22 = vector.multi_reduction <add>, %21, %cst_16 [0] : vector<16x256xf32> to vector<256xf32>
    %23 = vector.shape_cast %22 : vector<256xf32> to vector<1x256xf32>
    %24 = math.sqrt %23 : vector<1x256xf32>
    %cst_17 = arith.constant 1.000000e-10 : f32
    %25 = vector.broadcast %cst_17 : f32 to vector<1x256xf32>
    %26 = arith.addf %24, %25 : vector<1x256xf32>
    %27 = tpu.reciprocal %26 : vector<1x256xf32> -> vector<1x256xf32>
    %28 = vector.broadcast %27 : vector<1x256xf32> to vector<16x256xf32>
    %29 = arith.mulf %20, %28 : vector<16x256xf32>
    %c0_18 = arith.constant 0 : index
    %c0_19 = arith.constant 0 : index
    %c0_20 = arith.constant 0 : index
    %30 = vector.load %arg5[%c0_18, %c0_19, %c0_20] : memref<1x16x256xf32, #tpu.memory_space<vmem>>, vector<1x16x256xf32>
    %31 = vector.shape_cast %30 : vector<1x16x256xf32> to vector<16x256xf32>
    %32 = vector.shape_cast %29 : vector<16x256xf32> to vector<1x16x256xf32>
    tpu.vector_store %arg5[%c0_18, %c0_19, %c0_20], %32 {strides = array<i32>} : memref<1x16x256xf32, #tpu.memory_space<vmem>>, vector<1x16x256xf32>,
    %c2 = arith.constant 2 : index
    %c0_21 = arith.constant 0 : index
    %c0_22 = arith.constant 0 : index
    %33 = vector.load %arg3[%c2, %c0_21, %c0_22] : memref<3x16x16xf32, #tpu.memory_space<vmem>>, vector<1x16x16xf32>
    %34 = vector.shape_cast %33 : vector<1x16x16xf32> to vector<16x16xf32>
    %c2_23 = arith.constant 2 : index
    %c0_24 = arith.constant 0 : index
    %c0_25 = arith.constant 0 : index
    %35 = vector.load %arg4[%c2_23, %c0_24, %c0_25] : memref<3x16x1xf32, #tpu.memory_space<vmem>>, vector<1x16x1xf32>
    %36 = vector.shape_cast %35 : vector<1x16x1xf32> to vector<16x1xf32>
    %cst_26 = arith.constant dense<0.000000e+00> : vector<16x256xf32>
    %37 = tpu.matmul %34, %20, %cst_26 {dimension_numbers = #tpu.dot_dimension_numbers<[1], [0], [0], [1], [0, 0, 1, 1], [], []>} : vector<16x16xf32>, vector<16x256xf32>, vector<16x256xf32> -> vector<16x256xf32>
    %38 = vector.broadcast %36 : vector<16x1xf32> to vector<16x256xf32>
    %39 = arith.addf %37, %38 : vector<16x256xf32>
    %cst_27 = arith.constant 0.000000e+00 : f32
    %40 = vector.broadcast %cst_27 : f32 to vector<16x256xf32>
    %41 = arith.maximumf %39, %40 : vector<16x256xf32>
    %42 = arith.mulf %41, %41 : vector<16x256xf32>
    %cst_28 = arith.constant dense<0.000000e+00> : vector<256xf32>
    %43 = vector.multi_reduction <add>, %42, %cst_28 [0] : vector<16x256xf32> to vector<256xf32>
    %44 = vector.shape_cast %43 : vector<256xf32> to vector<1x256xf32>
    %45 = math.sqrt %44 : vector<1x256xf32>
    %cst_29 = arith.constant 1.000000e-10 : f32
    %46 = vector.broadcast %cst_29 : f32 to vector<1x256xf32>
    %47 = arith.addf %45, %46 : vector<1x256xf32>
    %48 = tpu.reciprocal %47 : vector<1x256xf32> -> vector<1x256xf32>
    %49 = vector.broadcast %48 : vector<1x256xf32> to vector<16x256xf32>
    %50 = arith.mulf %41, %49 : vector<16x256xf32>
    %c0_30 = arith.constant 0 : index
    %c0_31 = arith.constant 0 : index
    %c0_32 = arith.constant 0 : index
    %51 = vector.load %arg6[%c0_30, %c0_31, %c0_32] : memref<1x16x256xf32, #tpu.memory_space<vmem>>, vector<1x16x256xf32>
    %52 = vector.shape_cast %51 : vector<1x16x256xf32> to vector<16x256xf32>
    %53 = vector.shape_cast %50 : vector<16x256xf32> to vector<1x16x256xf32>
    tpu.vector_store %arg6[%c0_30, %c0_31, %c0_32], %53 {strides = array<i32>} : memref<1x16x256xf32, #tpu.memory_space<vmem>>, vector<1x16x256xf32>,
    return
  }
  func.func @transform_0(%arg0: i32, %arg1: i32) -> (i32, i32, i32) {
    %c0_i32 = arith.constant 0 : i32
    %c0_i32_0 = arith.constant 0 : i32
    return %arg0, %c0_i32, %arg1 : i32, i32, i32
  }
  func.func @transform_1(%arg0: i32, %arg1: i32) -> (i32, i32, i32) {
    %c0_i32 = arith.constant 0 : i32
    %c0_i32_0 = arith.constant 0 : i32
    %c0_i32_1 = arith.constant 0 : i32
    %c0_i32_2 = arith.constant 0 : i32
    return %c0_i32, %c0_i32_0, %c0_i32_1 : i32, i32, i32
  }
  func.func @transform_2(%arg0: i32, %arg1: i32) -> (i32, i32, i32) {
    %c0_i32 = arith.constant 0 : i32
    %c0_i32_0 = arith.constant 0 : i32
    %c0_i32_1 = arith.constant 0 : i32
    %c0_i32_2 = arith.constant 0 : i32
    return %c0_i32, %c0_i32_0, %c0_i32_1 : i32, i32, i32
  }
  func.func @transform_3(%arg0: i32, %arg1: i32) -> (i32, i32, i32) {
    %c0_i32 = arith.constant 0 : i32
    %c0_i32_0 = arith.constant 0 : i32
    return %arg0, %c0_i32, %arg1 : i32, i32, i32
  }
  func.func @transform_4(%arg0: i32, %arg1: i32) -> (i32, i32, i32) {
    %c0_i32 = arith.constant 0 : i32
    %c0_i32_0 = arith.constant 0 : i32
    return %arg0, %c0_i32, %arg1 : i32, i32, i32
  }
}

</mosaic_0001>

<llo_original>
// kernel: tpu_custom_call.1
$region0: #{tpu_custom_call.1}
  #allocation0 [shape = 'u32[]', space=smem, size = 0x4, offset = 0x4, fixed_abs, tag = 'smem constant byte address 0x4 - core index']
  #allocation1 [shape = 'u32[144,128]{1,0:T(1,128)}', space=vmem, size = 0x12000, scoped, tag = 'internal scratch']
  %s0 = inlined_call_operand.vmem [shape: f32[2,3,256], index: 0, kind: input, shape index: {}]
  %s1 = inlined_call_operand.vmem [shape: f32[3,16,16], index: 1, kind: input, shape index: {}]
  %s2 = inlined_call_operand.vmem [shape: f32[3,16,1], index: 2, kind: input, shape index: {}]
  %s3 = inlined_call_operand.hbm [shape: f32[2,16,256], index: 3, kind: output, shape index: {0}]
  %s4 = inlined_call_operand.hbm [shape: f32[2,16,256], index: 4, kind: output, shape index: {1}]
  %5 = xla_tuple %s3, %s4
  %s6 = sld [smem:[#allocation0]]
  $region53: #{tpu_custom_call.1} parent=0
    _
  %s8 = ssub.s32 1, %s6
  %s9 = scalar_select 0, %s8, %s6
  $region1: #{tpu_custom_call.1} parent=0
    #allocation2 [shape = 'u8[32768]{0}', space=vmem, size = 0x8000, scoped, tag = 'output window, operand 0']
    #allocation3 [shape = 's32[2]{0}', space=sflag, size = 0x8, scoped, tag = 'scoped memory for tpu_custom_call.1']
    #allocation4 [shape = 'u8[32768]{0}', space=vmem, size = 0x8000, scoped, tag = 'output window, operand 1']
    #allocation5 [shape = 's32[2]{0}', space=sflag, size = 0x8, scoped, tag = 'scoped memory for tpu_custom_call.1']
    %10 = vsyncpa [#allocation3], 0
    %s11 = scalar_lea.sflag [#allocation3], 1
    %12 = vsyncpa %s11, 0
    %13 = vsyncpa [#allocation5], 0
    %s14 = scalar_lea.sflag [#allocation5], 1
    %15 = vsyncpa %s14, 0
    loop: start=0, step=1, limit=4
    $region2: #{tpu_custom_call.1} parent=1 // loop_pre_header
      _
    $region3: #{tpu_custom_call.1} parent=1 // loop_header
      %s17 = sphi 0, %s21
      %p18 = scmp.ge.s32.totalorder %s17, 4
      %s24 = sphi 0, %s36
      %s25 = sphi 0, %s32
      %s26 = sphi 0, %s24
      %s27 = sphi 0, %s25
      %s28 = sphi 0, %s26
      %s29 = sphi 0, %s27
      %s41 = sphi 0, %s43
      %s44 = sphi 0, %s41
      %s45 = sphi 0, %s44
      %s61 = sphi 0, %s45
      %s65 = sphi 0, %s65
      %s67 = sphi 0, %s65
      %s68 = sphi 0, %s67
      %s82 = sphi 0, %s68
      %s86 = sphi 0, %s86
      %s88 = sphi 0, %s86
      %s89 = sphi 0, %s88
      %s103 = sphi 0, %s89
      %s111 = sphi 0, %s113
      %s114 = sphi 0, %s111
      %s115 = sphi 0, %s114
      %s131 = sphi 0, %s115
      %s139 = sphi 0, %s141
      %s142 = sphi 0, %s139
      %s143 = sphi 0, %s142
      %s159 = sphi 0, %s143
    $region4: #{tpu_custom_call.1} parent=1 // loop_header_branch
      %20 = sbr.rel (%p18) target = $region8
    $region5: #{tpu_custom_call.1} parent=1 // loop_body
      %s22 = ssub.s32 %s17, 1
      %s23 = ssub.s32 %s17, 2
      %s30 = sadd.s32 1, %s25
      %p31 = scmp.ge.s32.totalorder %s30, 1
      %s32 = scalar_select %p31, 0, %s30
      %s33 = sadd.s32 1, %s24
      %s34 = scalar_select %p31, %s33, %s24
      %p35 = scmp.ge.s32.totalorder %s34, 2
      %s36 = scalar_select %p35, 0, %s34
      %s37 = ssub.s32 %s24, %s36
      %s38 = ssub.s32 %s25, %s32
      %s39 = sor.u32 %s37, %s38
      %p40 = scmp.eq.s32.totalorder %s39, 0
      %s42 = sadd.s32 %s41, 1
      %s43 = scalar_select %p40, %s41, %s42
      %p46 = pneg %p40
      %p47 = scmp.eq.s32.totalorder %s17, 1
      %p48 = por %p46, %p47
      %p49 = scmp.ne.s32.totalorder %s41, %s44
      %p50 = scmp.eq.s32.totalorder %s17, 0
      %p51 = por %p49, %p50
      %p52 = scmp.ne.s32.totalorder %s41, %s44
      %p53 = scmp.eq.s32.totalorder %s22, 1
      %p54 = por %p52, %p53
      %p55 = scmp.ne.s32.totalorder %s44, %s45
      %p56 = scmp.eq.s32.totalorder %s22, 0
      %p57 = por %p55, %p56
      %p58 = scmp.ne.s32.totalorder %s44, %s45
      %p59 = scmp.eq.s32.totalorder %s23, 1
      %p60 = por %p58, %p59
      %p62 = scmp.ne.s32.totalorder %s45, %s61
      %p63 = scmp.eq.s32.totalorder %s23, 0
      %p64 = por %p62, %p63
      %s66 = sadd.s32 %s65, 1
      %p69 = scmp.eq.s32.totalorder %s17, 1
      %p70 = scmp.ne.s32.totalorder %s65, %s67
      %p71 = scmp.eq.s32.totalorder %s17, 0
      %p72 = por %p70, %p71
      %p73 = scmp.ne.s32.totalorder %s65, %s67
      %p74 = scmp.eq.s32.totalorder %s22, 1
      %p75 = por %p73, %p74
      %p76 = scmp.ne.s32.totalorder %s67, %s68
      %p77 = scmp.eq.s32.totalorder %s22, 0
      %p78 = por %p76, %p77
      %p79 = scmp.ne.s32.totalorder %s67, %s68
      %p80 = scmp.eq.s32.totalorder %s23, 1
      %p81 = por %p79, %p80
      %p83 = scmp.ne.s32.totalorder %s68, %s82
      %p84 = scmp.eq.s32.totalorder %s23, 0
      %p85 = por %p83, %p84
      %s87 = sadd.s32 %s86, 1
      %p90 = scmp.eq.s32.totalorder %s17, 1
      %p91 = scmp.ne.s32.totalorder %s86, %s88
      %p92 = scmp.eq.s32.totalorder %s17, 0
      %p93 = por %p91, %p92
      %p94 = scmp.ne.s32.totalorder %s86, %s88
      %p95 = scmp.eq.s32.totalorder %s22, 1
      %p96 = por %p94, %p95
      %p97 = scmp.ne.s32.totalorder %s88, %s89
      %p98 = scmp.eq.s32.totalorder %s22, 0
      %p99 = por %p97, %p98
      %p100 = scmp.ne.s32.totalorder %s88, %s89
      %p101 = scmp.eq.s32.totalorder %s23, 1
      %p102 = por %p100, %p101
      %p104 = scmp.ne.s32.totalorder %s89, %s103
      %p105 = scmp.eq.s32.totalorder %s23, 0
      %p106 = por %p104, %p105
      %s107 = ssub.s32 %s24, %s36
      %s108 = ssub.s32 %s25, %s32
      %s109 = sor.u32 %s107, %s108
      %p110 = scmp.eq.s32.totalorder %s109, 0
      %s112 = sadd.s32 %s111, 1
      %s113 = scalar_select %p110, %s111, %s112
      %p116 = pneg %p110
      %p117 = scmp.eq.s32.totalorder %s17, 1
      %p118 = por %p116, %p117
      %p119 = scmp.ne.s32.totalorder %s111, %s114
      %p120 = scmp.eq.s32.totalorder %s17, 0
      %p121 = por %p119, %p120
      %p122 = scmp.ne.s32.totalorder %s111, %s114
      %p123 = scmp.eq.s32.totalorder %s22, 1
      %p124 = por %p122, %p123
      %p125 = scmp.ne.s32.totalorder %s114, %s115
      %p126 = scmp.eq.s32.totalorder %s22, 0
      %p127 = por %p125, %p126
      %p128 = scmp.ne.s32.totalorder %s114, %s115
      %p129 = scmp.eq.s32.totalorder %s23, 1
      %p130 = por %p128, %p129
      %p132 = scmp.ne.s32.totalorder %s115, %s131
      %p133 = scmp.eq.s32.totalorder %s23, 0
      %p134 = por %p132, %p133
      %s135 = ssub.s32 %s24, %s36
      %s136 = ssub.s32 %s25, %s32
      %s137 = sor.u32 %s135, %s136
      %p138 = scmp.eq.s32.totalorder %s137, 0
      %s140 = sadd.s32 %s139, 1
      %s141 = scalar_select %p138, %s139, %s140
      %p144 = pneg %p138
      %p145 = scmp.eq.s32.totalorder %s17, 1
      %p146 = por %p144, %p145
      %p147 = scmp.ne.s32.totalorder %s139, %s142
      %p148 = scmp.eq.s32.totalorder %s17, 0
      %p149 = por %p147, %p148
      %p150 = scmp.ne.s32.totalorder %s139, %s142
      %p151 = scmp.eq.s32.totalorder %s22, 1
      %p152 = por %p150, %p151
      %p153 = scmp.ne.s32.totalorder %s142, %s143
      %p154 = scmp.eq.s32.totalorder %s22, 0
      %p155 = por %p153, %p154
      %p156 = scmp.ne.s32.totalorder %s142, %s143
      %p157 = scmp.eq.s32.totalorder %s23, 1
      %p158 = por %p156, %p157
      %p160 = scmp.ne.s32.totalorder %s143, %s159
      %p161 = scmp.eq.s32.totalorder %s23, 0
      %p162 = por %p160, %p161
      %p163 = scmp.le.s32.totalorder 1, %s17
      %p164 = scmp.lt.s32.totalorder %s17, 3
      %p165 = pnand %p163, %p164
      %p166 = pneg %p165
      // Predicated region
      $region9: #{tpu_custom_call.1} parent=5 // pred_check
        _
      $region10: #{tpu_custom_call.1} parent=5 // pred_check_branch
        %168 = sbr.rel (%p165) target = $region12
      $region11: #{tpu_custom_call.1} parent=5 // pred_region
        %s169 = ssub.s32 %s17, 1
        // Predicated region
        $region13: #{tpu_custom_call.1} parent=11 // pred_check
          %p170 = pneg %p78
        $region14: #{tpu_custom_call.1} parent=11 // pred_check_branch
          %172 = sbr.rel (%p170) target = $region16
        $region15: #{tpu_custom_call.1} parent=11 // pred_region
          _
        $region16: #{tpu_custom_call.1} parent=11 // pred_fallthru
          _
        // Predicated region
        $region17: #{tpu_custom_call.1} parent=11 // pred_check
          %p173 = pneg %p99
        $region18: #{tpu_custom_call.1} parent=11 // pred_check_branch
          %175 = sbr.rel (%p173) target = $region20
        $region19: #{tpu_custom_call.1} parent=11 // pred_region
          _
        $region20: #{tpu_custom_call.1} parent=11 // pred_fallthru
          _
      $region12: #{tpu_custom_call.1} parent=5 // pred_fallthru
        _
      %p176 = scmp.lt.s32.totalorder %s17, 2
      // Predicated region
      $region21: #{tpu_custom_call.1} parent=5 // pred_check
        %p177 = pneg %p176
      $region22: #{tpu_custom_call.1} parent=5 // pred_check_branch
        %179 = sbr.rel (%p177) target = $region24
      $region23: #{tpu_custom_call.1} parent=5 // pred_region
        // Predicated region
        $region25: #{tpu_custom_call.1} parent=23 // pred_check
          %p180 = pneg %p51
        $region26: #{tpu_custom_call.1} parent=23 // pred_check_branch
          %182 = sbr.rel (%p180) target = $region28
        $region27: #{tpu_custom_call.1} parent=23 // pred_region
          %s183 = smul.u32 2, %s25
          %p184 = scmp.lt.s32.totalorder %s24, 1
          %s185 = scalar_select %p184, %s24, 1
          %p186 = scmp.lt.s32.totalorder %s183, 1
          %s187 = scalar_select %p186, %s183, 1
          %s188 = smul.addr %s185, 2
          %s189 = sadd.s32 %s187, %s188
          %s190 = smul.addr %s189, 4
          %s191 = scalar_lea.vmem %s0, %s190
          %s192 = smul.u32 2, %s25
        $region28: #{tpu_custom_call.1} parent=23 // pred_fallthru
          _
      $region24: #{tpu_custom_call.1} parent=5 // pred_fallthru
        _
      %p193 = scmp.le.s32.totalorder 1, %s17
      %p194 = scmp.lt.s32.totalorder %s17, 3
      %p195 = pnand %p193, %p194
      %p196 = pneg %p195
      // Predicated region
      $region29: #{tpu_custom_call.1} parent=5 // pred_check
        _
      $region30: #{tpu_custom_call.1} parent=5 // pred_check_branch
        %198 = sbr.rel (%p195) target = $region32
      $region31: #{tpu_custom_call.1} parent=5 // pred_region
        %s199 = ssub.s32 %s17, 1
        %s200 = smul.u32 2, %s27
        %p201 = scmp.lt.s32.totalorder %s26, 1
        %s202 = scalar_select %p201, %s26, 1
        %p203 = scmp.lt.s32.totalorder %s200, 1
        %s204 = scalar_select %p203, %s200, 1
        %s205 = smul.addr %s202, 2
        %s206 = sadd.s32 %s204, %s205
        %s207 = smul.addr %s206, 4
        %s208 = scalar_lea.vmem %s0, %s207
        %p209 = pneg %p57
        %p210 = pneg %p54
        %p211 = pneg %p78
        %p212 = pneg %p75
        %p213 = pneg %p99
        %p214 = pneg %p96
        %p215 = pneg %p127
        %p216 = pneg %p124
        %s217 = sand.u32 %s114, 1
        %s218 = scalar_lea.sflag [#allocation3], %s217
        %s219 = sand.u32 %s114, 1
        %s220 = smul.addr %s219, 32
        %s221 = scalar_lea.vmem [#allocation2], %s220
        %p222 = pneg %p155
        %p223 = pneg %p152
        %s224 = sand.u32 %s142, 1
        %s225 = scalar_lea.sflag [#allocation5], %s224
        %s226 = sand.u32 %s142, 1
        %s227 = smul.addr %s226, 32
        %s228 = scalar_lea.vmem [#allocation4], %s227
        %s229 = smul.u32 2, %s27
        %p230 = scmp.lt.s32.totalorder %s26, 1
        %s231 = scalar_select %p230, %s26, 1
        %p232 = scmp.lt.s32.totalorder %s229, 1
        %s233 = scalar_select %p232, %s229, 1
        %s234 = smul.addr %s231, 2
        %s235 = sadd.s32 %s233, %s234
        %s236 = smul.addr %s235, 4
        %s237 = scalar_lea.vmem %s0, %s236
        %s238 = smul.u32 2, %s27
        %s239 = smul.u32 2, %s27
        %s240 = smul.u32 2, %s27
        %v241 = vld [vmem:[%s237] sm:$0x77]
        %v242 = vld [vmem:[%s1] sm:$0xff]
        %v243 = vld [vmem:[%s1 + $0x8] sm:$0xff]
        %v244 = vld [vmem:[%s2] sm:$0xff]
        %v245 = vld [vmem:[%s2 + $0x8] sm:$0xff]
        %247 = vset.pattern.permute.xlu0 0
        %248 = vperm.xlu0 %247, %v244
        %v249 = vpop.permute.xlu0 %248
        %252 = vset.pattern.permute.xlu0 0
        %253 = vperm.xlu0 %252, %v245
        %v254 = vpop.permute.xlu0 %253
        %v257 = vcombine.high %v241, %v241
        %vm258 = vcmask 23552
        %v260 = vsel %vm258, %v242, 0
        %v263 = vsel %vm258, %v243, 0
        %vm265 = vcmask 1042432
        %v266 = vsel %vm265, %v241, 0
        %v268 = vsel %vm265, %v257, 0
        %270 = vmatprep.subr.mxu0 %v268
        %271 = vmatpush1.msra.mxu0 %v266
        %272 = vmatprep.subr.mxu0 0.0
        %273 = vmatpush1.msra.mxu0 0.0
        %274 = vmatprep.subr.mxu0 0.0
        %275 = vmatpush1.msra.mxu0 0.0
        %276 = vmatprep.subr.mxu0 0.0
        %277 = vmatpush1.msra.mxu0 0.0
        %278 = vmatprep.subr.mxu0 0.0
        %279 = vmatpush1.msra.mxu0 0.0
        %280 = vmatprep.subr.mxu0 0.0
        %281 = vmatpush1.msra.mxu0 0.0
        %282 = vmatprep.subr.mxu0 0.0
        %283 = vmatpush1.msra.mxu0 0.0
        %284 = vmatprep.subr.mxu0 0.0
        %285 = vmatpush1.msra.mxu0 0.0
        %286 = vmatprep.subr.mxu0 0.0
        %287 = vmatpush1.msra.mxu0 0.0
        %288 = vmatprep.subr.mxu0 0.0
        %289 = vmatpush1.msra.mxu0 0.0
        %290 = vmatprep.subr.mxu0 0.0
        %291 = vmatpush1.msra.mxu0 0.0
        %292 = vmatprep.subr.mxu0 0.0
        %293 = vmatpush1.msra.mxu0 0.0
        %294 = vmatprep.subr.mxu0 0.0
        %295 = vmatpush1.msra.mxu0 0.0
        %296 = vmatprep.subr.mxu0 0.0
        %297 = vmatpush1.msra.mxu0 0.0
        %298 = vmatprep.subr.mxu0 0.0
        %299 = vmatpush1.msra.mxu0 0.0
        %300 = vmatprep.subr.mxu0 0.0
        %301 = vmatpush1.msra.mxu0 0.0
        %302 = vmatprep.subr.mxu0 0.0
        %303 = vmatpush1.msra.mxu0 0.0
        %304 = vmatprep.subr.mxu0 0.0
        %305 = vmatpush1.msra.mxu0 0.0
        %306 = vmatprep.subr.mxu0 0.0
        %307 = vmatpush1.msra.mxu0 0.0
        %308 = vmatprep.subr.mxu0 0.0
        %309 = vmatpush1.msra.mxu0 0.0
        %310 = vmatprep.subr.mxu0 0.0
        %311 = vmatpush1.msra.mxu0 0.0
        %312 = vmatprep.subr.mxu0 0.0
        %313 = vmatpush1.msra.mxu0 0.0
        %314 = vmatprep.subr.mxu0 0.0
        %315 = vmatpush1.msra.mxu0 0.0
        %316 = vmatprep.subr.mxu0 0.0
        %317 = vmatpush1.msra.mxu0 0.0
        %318 = vmatprep.subr.mxu0 0.0
        %319 = vmatpush1.msra.mxu0 0.0
        %320 = vmatprep.subr.mxu0 0.0
        %321 = vmatpush1.msra.mxu0 0.0
        %322 = vmatprep.subr.mxu0 0.0
        %323 = vmatpush1.msra.mxu0 0.0
        %324 = vmatprep.subr.mxu0 0.0
        %325 = vmatpush1.msra.mxu0 0.0
        %326 = vmatprep.subr.mxu0 0.0
        %327 = vmatpush1.msra.mxu0 0.0
        %328 = vmatprep.subr.mxu0 0.0
        %329 = vmatpush1.msra.mxu0 0.0
        %330 = vmatprep.subr.mxu0 0.0
        %331 = vmatpush1.msra.mxu0 0.0
        %332 = vmatprep.subr.mxu0 0.0
        %333 = vmatpush1.msra.mxu0 0.0
        %334 = vmatprep.mubr.f32.mxu0 0.0
        %335 = vmatmul.mubr.f32.gmra.mrb[0].mxu0 %v260
        %v336 = vpop.f32.mrb[0].mxu0
        %v337 = vadd.f32 %v249, %v336
        %v338 = vpop.f32.mrb[0].mxu0
        %v339 = vadd.f32 %v249, %v338
        %340 = vmatprep.mubr.f32.mxu0 0.0
        %341 = vmatmul.mubr.f32.gmra.mrb[0].mxu0 %v263
        %v342 = vpop.f32.mrb[0].mxu0
        %v343 = vadd.f32 %v254, %v342
        %v344 = vpop.f32.mrb[0].mxu0
        %v345 = vadd.f32 %v254, %v344
        %346 = vdwg.mxu0
        %v347 = vmax.f32 %v337, 0.0
        %v348 = vmax.f32 %v339, 0.0
        %v349 = vmax.f32 %v343, 0.0
        %v350 = vmax.f32 %v345, 0.0
        %s351 = scalar_lea.vmem %s1, 16
        %v352 = vld [vmem:[%s351] sm:$0xff]
        %v353 = vld [vmem:[%s351 + $0x8] sm:$0xff]
        %s354 = scalar_lea.vmem %s2, 16
        %v355 = vld [vmem:[%s354] sm:$0xff]
        %v356 = vld [vmem:[%s354 + $0x8] sm:$0xff]
        %358 = vset.pattern.permute.xlu0 0
        %359 = vperm.xlu0 %358, %v355
        %v360 = vpop.permute.xlu0 %359
        %363 = vset.pattern.permute.xlu0 0
        %364 = vperm.xlu0 %363, %v356
        %v365 = vpop.permute.xlu0 %364
        %vm367 = vcmask 130048
        %v369 = vsel %vm367, %v352, 0
        %v372 = vsel %vm367, %v353, 0
        %374 = vmatprep.subr.mxu0 %v348
        %375 = vmatpush1.msra.mxu0 %v347
        %376 = vmatprep.subr.mxu0 %v350
        %377 = vmatpush1.msra.mxu0 %v349
        %378 = vmatprep.subr.mxu0 0.0
        %379 = vmatpush1.msra.mxu0 0.0
        %380 = vmatprep.subr.mxu0 0.0
        %381 = vmatpush1.msra.mxu0 0.0
        %382 = vmatprep.subr.mxu0 0.0
        %383 = vmatpush1.msra.mxu0 0.0
        %384 = vmatprep.subr.mxu0 0.0
        %385 = vmatpush1.msra.mxu0 0.0
        %386 = vmatprep.subr.mxu0 0.0
        %387 = vmatpush1.msra.mxu0 0.0
        %388 = vmatprep.subr.mxu0 0.0
        %389 = vmatpush1.msra.mxu0 0.0
        %390 = vmatprep.subr.mxu0 0.0
        %391 = vmatpush1.msra.mxu0 0.0
        %392 = vmatprep.subr.mxu0 0.0
        %393 = vmatpush1.msra.mxu0 0.0
        %394 = vmatprep.subr.mxu0 0.0
        %395 = vmatpush1.msra.mxu0 0.0
        %396 = vmatprep.subr.mxu0 0.0
        %397 = vmatpush1.msra.mxu0 0.0
        %398 = vmatprep.subr.mxu0 0.0
        %399 = vmatpush1.msra.mxu0 0.0
        %400 = vmatprep.subr.mxu0 0.0
        %401 = vmatpush1.msra.mxu0 0.0
        %402 = vmatprep.subr.mxu0 0.0
        %403 = vmatpush1.msra.mxu0 0.0
        %404 = vmatprep.subr.mxu0 0.0
        %405 = vmatpush1.msra.mxu0 0.0
        %406 = vmatprep.subr.mxu0 0.0
        %407 = vmatpush1.msra.mxu0 0.0
        %408 = vmatprep.subr.mxu0 0.0
        %409 = vmatpush1.msra.mxu0 0.0
        %410 = vmatprep.subr.mxu0 0.0
        %411 = vmatpush1.msra.mxu0 0.0
        %412 = vmatprep.subr.mxu0 0.0
        %413 = vmatpush1.msra.mxu0 0.0
        %414 = vmatprep.subr.mxu0 0.0
        %415 = vmatpush1.msra.mxu0 0.0
        %416 = vmatprep.subr.mxu0 0.0
        %417 = vmatpush1.msra.mxu0 0.0
        %418 = vmatprep.subr.mxu0 0.0
        %419 = vmatpush1.msra.mxu0 0.0
        %420 = vmatprep.subr.mxu0 0.0
        %421 = vmatpush1.msra.mxu0 0.0
        %422 = vmatprep.subr.mxu0 0.0
        %423 = vmatpush1.msra.mxu0 0.0
        %424 = vmatprep.subr.mxu0 0.0
        %425 = vmatpush1.msra.mxu0 0.0
        %426 = vmatprep.subr.mxu0 0.0
        %427 = vmatpush1.msra.mxu0 0.0
        %428 = vmatprep.subr.mxu0 0.0
        %429 = vmatpush1.msra.mxu0 0.0
        %430 = vmatprep.subr.mxu0 0.0
        %431 = vmatpush1.msra.mxu0 0.0
        %432 = vmatprep.subr.mxu0 0.0
        %433 = vmatpush1.msra.mxu0 0.0
        %434 = vmatprep.subr.mxu0 0.0
        %435 = vmatpush1.msra.mxu0 0.0
        %436 = vmatprep.subr.mxu0 0.0
        %437 = vmatpush1.msra.mxu0 0.0
        %438 = vmatprep.mubr.f32.mxu0 0.0
        %439 = vmatmul.mubr.f32.gmra.mrb[0].mxu0 %v369
        %v440 = vpop.f32.mrb[0].mxu0
        %v441 = vadd.f32 %v360, %v440
        %v442 = vpop.f32.mrb[0].mxu0
        %v443 = vadd.f32 %v360, %v442
        %444 = vmatprep.mubr.f32.mxu0 0.0
        %445 = vmatmul.mubr.f32.gmra.mrb[0].mxu0 %v372
        %v446 = vpop.f32.mrb[0].mxu0
        %v447 = vadd.f32 %v365, %v446
        %v448 = vpop.f32.mrb[0].mxu0
        %v449 = vadd.f32 %v365, %v448
        %450 = vdwg.mxu0
        %v451 = vmax.f32 %v441, 0.0
        %v452 = vmax.f32 %v443, 0.0
        %v453 = vmax.f32 %v447, 0.0
        %v454 = vmax.f32 %v449, 0.0
        %v455 = vmul.f32 %v451, %v451
        %v456 = vmul.f32 %v452, %v452
        %v457 = vmul.f32 %v453, %v453
        %v458 = vmul.f32 %v454, %v454
        %v459 = vadd.f32 %v455, %v457
        %v460 = vrot.slane %v459, 4
        %v461 = vadd.f32 %v459, %v460
        %v462 = vrot.slane %v461, 2
        %v463 = vadd.f32 %v461, %v462
        %v464 = vrot.slane %v463, 1
        %v465 = vadd.f32 %v463, %v464
        %v466 = vadd.f32 %v456, %v458
        %v467 = vrot.slane %v466, 4
        %v468 = vadd.f32 %v466, %v467
        %v469 = vrot.slane %v468, 2
        %v470 = vadd.f32 %v468, %v469
        %v471 = vrot.slane %v470, 1
        %v472 = vadd.f32 %v470, %v471
        %v473 = vrsqrt.pop %v465
        %v474 = vmul.f32 %v465, %v473
        %vm475 = vcmp.eq.f32.partialorder %v465, inf
        %v476 = vsel %vm475, %v465, %v474
        %vm477 = vcmp.eq.f32.partialorder %v465, 0.0
        %v478 = vand.u32 %v465, 2147483648
        %v479 = vsel %vm477, %v478, %v476
        %v480 = vrsqrt.pop %v472
        %v481 = vmul.f32 %v472, %v480
        %vm482 = vcmp.eq.f32.partialorder %v472, inf
        %v483 = vsel %vm482, %v472, %v481
        %vm484 = vcmp.eq.f32.partialorder %v472, 0.0
        %v485 = vand.u32 %v472, 2147483648
        %v486 = vsel %vm484, %v485, %v483
        %v487 = vadd.f32 %v479, 1e-10
        %v488 = vadd.f32 %v486, 1e-10
        %v489 = vrcp.pop %v487
        %v490 = vrcp.pop %v488
        %v491 = vmul.f32 %v451, %v489
        %v492 = vmul.f32 %v452, %v490
        %v493 = vmul.f32 %v453, %v489
        %v494 = vmul.f32 %v454, %v490
        %495 = vst [vmem:[%s221] sm:$0xff] %v491
        %496 = vst [vmem:[%s221 + $0x8] sm:$0xff] %v492
        %497 = vst [vmem:[%s221 + $0x10] sm:$0xff] %v493
        %498 = vst [vmem:[%s221 + $0x18] sm:$0xff] %v494
        %s499 = scalar_lea.vmem %s1, 32
        %v500 = vld [vmem:[%s499] sm:$0xff]
        %v501 = vld [vmem:[%s499 + $0x8] sm:$0xff]
        %s502 = scalar_lea.vmem %s2, 32
        %v503 = vld [vmem:[%s502] sm:$0xff]
        %v504 = vld [vmem:[%s502 + $0x8] sm:$0xff]
        %506 = vset.pattern.permute.xlu0 0
        %507 = vperm.xlu0 %506, %v503
        %v508 = vpop.permute.xlu0 %507
        %511 = vset.pattern.permute.xlu0 0
        %512 = vperm.xlu0 %511, %v504
        %v513 = vpop.permute.xlu0 %512
        %v516 = vsel %vm367, %v500, 0
        %v519 = vsel %vm367, %v501, 0
        %521 = vmatprep.subr.mxu0 %v452
        %522 = vmatpush1.msra.mxu0 %v451
        %523 = vmatprep.subr.mxu0 %v454
        %524 = vmatpush1.msra.mxu0 %v453
        %525 = vmatprep.subr.mxu0 0.0
        %526 = vmatpush1.msra.mxu0 0.0
        %527 = vmatprep.subr.mxu0 0.0
        %528 = vmatpush1.msra.mxu0 0.0
        %529 = vmatprep.subr.mxu0 0.0
        %530 = vmatpush1.msra.mxu0 0.0
        %531 = vmatprep.subr.mxu0 0.0
        %532 = vmatpush1.msra.mxu0 0.0
        %533 = vmatprep.subr.mxu0 0.0
        %534 = vmatpush1.msra.mxu0 0.0
        %535 = vmatprep.subr.mxu0 0.0
        %536 = vmatpush1.msra.mxu0 0.0
        %537 = vmatprep.subr.mxu0 0.0
        %538 = vmatpush1.msra.mxu0 0.0
        %539 = vmatprep.subr.mxu0 0.0
        %540 = vmatpush1.msra.mxu0 0.0
        %541 = vmatprep.subr.mxu0 0.0
        %542 = vmatpush1.msra.mxu0 0.0
        %543 = vmatprep.subr.mxu0 0.0
        %544 = vmatpush1.msra.mxu0 0.0
        %545 = vmatprep.subr.mxu0 0.0
        %546 = vmatpush1.msra.mxu0 0.0
        %547 = vmatprep.subr.mxu0 0.0
        %548 = vmatpush1.msra.mxu0 0.0
        %549 = vmatprep.subr.mxu0 0.0
        %550 = vmatpush1.msra.mxu0 0.0
        %551 = vmatprep.subr.mxu0 0.0
        %552 = vmatpush1.msra.mxu0 0.0
        %553 = vmatprep.subr.mxu0 0.0
        %554 = vmatpush1.msra.mxu0 0.0
        %555 = vmatprep.subr.mxu0 0.0
        %556 = vmatpush1.msra.mxu0 0.0
        %557 = vmatprep.subr.mxu0 0.0
        %558 = vmatpush1.msra.mxu0 0.0
        %559 = vmatprep.subr.mxu0 0.0
        %560 = vmatpush1.msra.mxu0 0.0
        %561 = vmatprep.subr.mxu0 0.0
        %562 = vmatpush1.msra.mxu0 0.0
        %563 = vmatprep.subr.mxu0 0.0
        %564 = vmatpush1.msra.mxu0 0.0
        %565 = vmatprep.subr.mxu0 0.0
        %566 = vmatpush1.msra.mxu0 0.0
        %567 = vmatprep.subr.mxu0 0.0
        %568 = vmatpush1.msra.mxu0 0.0
        %569 = vmatprep.subr.mxu0 0.0
        %570 = vmatpush1.msra.mxu0 0.0
        %571 = vmatprep.subr.mxu0 0.0
        %572 = vmatpush1.msra.mxu0 0.0
        %573 = vmatprep.subr.mxu0 0.0
        %574 = vmatpush1.msra.mxu0 0.0
        %575 = vmatprep.subr.mxu0 0.0
        %576 = vmatpush1.msra.mxu0 0.0
        %577 = vmatprep.subr.mxu0 0.0
        %578 = vmatpush1.msra.mxu0 0.0
        %579 = vmatprep.subr.mxu0 0.0
        %580 = vmatpush1.msra.mxu0 0.0
        %581 = vmatprep.subr.mxu0 0.0
        %582 = vmatpush1.msra.mxu0 0.0
        %583 = vmatprep.subr.mxu0 0.0
        %584 = vmatpush1.msra.mxu0 0.0
        %585 = vmatprep.mubr.f32.mxu0 0.0
        %586 = vmatmul.mubr.f32.gmra.mrb[0].mxu0 %v516
        %v587 = vpop.f32.mrb[0].mxu0
        %v588 = vadd.f32 %v508, %v587
        %v589 = vpop.f32.mrb[0].mxu0
        %v590 = vadd.f32 %v508, %v589
        %591 = vmatprep.mubr.f32.mxu0 0.0
        %592 = vmatmul.mubr.f32.gmra.mrb[0].mxu0 %v519
        %v593 = vpop.f32.mrb[0].mxu0
        %v594 = vadd.f32 %v513, %v593
        %v595 = vpop.f32.mrb[0].mxu0
        %v596 = vadd.f32 %v513, %v595
        %597 = vdwg.mxu0
        %v598 = vmax.f32 %v588, 0.0
        %v599 = vmax.f32 %v590, 0.0
        %v600 = vmax.f32 %v594, 0.0
        %v601 = vmax.f32 %v596, 0.0
        %v602 = vmul.f32 %v598, %v598
        %v603 = vmul.f32 %v599, %v599
        %v604 = vmul.f32 %v600, %v600
        %v605 = vmul.f32 %v601, %v601
        %v606 = vadd.f32 %v602, %v604
        %v607 = vrot.slane %v606, 4
        %v608 = vadd.f32 %v606, %v607
        %v609 = vrot.slane %v608, 2
        %v610 = vadd.f32 %v608, %v609
        %v611 = vrot.slane %v610, 1
        %v612 = vadd.f32 %v610, %v611
        %v613 = vadd.f32 %v603, %v605
        %v614 = vrot.slane %v613, 4
        %v615 = vadd.f32 %v613, %v614
        %v616 = vrot.slane %v615, 2
        %v617 = vadd.f32 %v615, %v616
        %v618 = vrot.slane %v617, 1
        %v619 = vadd.f32 %v617, %v618
        %v620 = vrsqrt.pop %v612
        %v621 = vmul.f32 %v612, %v620
        %vm622 = vcmp.eq.f32.partialorder %v612, inf
        %v623 = vsel %vm622, %v612, %v621
        %vm624 = vcmp.eq.f32.partialorder %v612, 0.0
        %v625 = vand.u32 %v612, 2147483648
        %v626 = vsel %vm624, %v625, %v623
        %v627 = vrsqrt.pop %v619
        %v628 = vmul.f32 %v619, %v627
        %vm629 = vcmp.eq.f32.partialorder %v619, inf
        %v630 = vsel %vm629, %v619, %v628
        %vm631 = vcmp.eq.f32.partialorder %v619, 0.0
        %v632 = vand.u32 %v619, 2147483648
        %v633 = vsel %vm631, %v632, %v630
        %v634 = vadd.f32 %v626, 1e-10
        %v635 = vadd.f32 %v633, 1e-10
        %v636 = vrcp.pop %v634
        %v637 = vrcp.pop %v635
        %v638 = vmul.f32 %v598, %v636
        %v639 = vmul.f32 %v599, %v637
        %v640 = vmul.f32 %v600, %v636
        %v641 = vmul.f32 %v601, %v637
        %642 = vst [vmem:[%s228] sm:$0xff] %v638
        %643 = vst [vmem:[%s228 + $0x8] sm:$0xff] %v639
        %644 = vst [vmem:[%s228 + $0x10] sm:$0xff] %v640
        %645 = vst [vmem:[%s228 + $0x18] sm:$0xff] %v641
        %s646 = sand.u32 %s114, 1
        %s647 = scalar_lea.sflag [#allocation3], %s646
        %s648 = sand.u32 %s114, 1
        %s649 = smul.addr %s648, 32
        %s650 = scalar_lea.vmem [#allocation2], %s649
        %s651 = sand.u32 %s142, 1
        %s652 = scalar_lea.sflag [#allocation5], %s651
        %s653 = sand.u32 %s142, 1
        %s654 = smul.addr %s653, 32
        %s655 = scalar_lea.vmem [#allocation4], %s654
        // Predicated region
        $region33: #{tpu_custom_call.1} parent=31 // pred_check
          %p656 = pneg %p124
        $region34: #{tpu_custom_call.1} parent=31 // pred_check_branch
          %658 = sbr.rel (%p656) target = $region36
        $region35: #{tpu_custom_call.1} parent=31 // pred_region
          %s659 = smul.u32 2, %s27
          %s661 = ssub.s32 512, 512
          %662 = vsyncadd %s647, %s661
          %s663 = smul.addr %s26, 4
          %s664 = sadd.s32 %s659, %s663
          %s665 = smul.addr %s664, 128
          %s666 = scalar_lea.hbm %s3, %s665
          %s667 = sshll.u32 %s650, 4
          %s668 = int_to_ptr.vmem [resolvable:$true] %s667
          %673 = dma.vmem_to_hbm [thread:$0]  %s668, 512, %s666, %s647, 256, 256, 16
        $region36: #{tpu_custom_call.1} parent=31 // pred_fallthru
          _
        // Predicated region
        $region37: #{tpu_custom_call.1} parent=31 // pred_check
          %p674 = pneg %p152
        $region38: #{tpu_custom_call.1} parent=31 // pred_check_branch
          %676 = sbr.rel (%p674) target = $region40
        $region39: #{tpu_custom_call.1} parent=31 // pred_region
          %s677 = smul.u32 2, %s27
          %s679 = ssub.s32 512, 512
          %680 = vsyncadd %s652, %s679
          %s681 = smul.addr %s26, 4
          %s682 = sadd.s32 %s677, %s681
          %s683 = smul.addr %s682, 128
          %s684 = scalar_lea.hbm %s4, %s683
          %s685 = sshll.u32 %s655, 4
          %s686 = int_to_ptr.vmem [resolvable:$true] %s685
          %691 = dma.vmem_to_hbm [thread:$0]  %s686, 512, %s684, %s652, 256, 256, 16
        $region40: #{tpu_custom_call.1} parent=31 // pred_fallthru
          _
      $region32: #{tpu_custom_call.1} parent=5 // pred_fallthru
        _
      %p692 = scmp.le.s32.totalorder 2, %s17
      // Predicated region
      $region41: #{tpu_custom_call.1} parent=5 // pred_check
        %p693 = pneg %p692
      $region42: #{tpu_custom_call.1} parent=5 // pred_check_branch
        %695 = sbr.rel (%p693) target = $region44
      $region43: #{tpu_custom_call.1} parent=5 // pred_region
        %s696 = ssub.s32 %s17, 2
        // Predicated region
        $region45: #{tpu_custom_call.1} parent=43 // pred_check
          %p697 = pneg %p130
        $region46: #{tpu_custom_call.1} parent=43 // pred_check_branch
          %699 = sbr.rel (%p697) target = $region48
        $region47: #{tpu_custom_call.1} parent=43 // pred_region
          %s700 = sand.u32 %s115, 1
          %s701 = scalar_lea.sflag [#allocation3], %s700
          %s702 = sand.u32 %s115, 1
          %s703 = smul.addr %s702, 32
          %s704 = scalar_lea.vmem [#allocation2], %s703
          %705 = dma.done %s701, 512
        $region48: #{tpu_custom_call.1} parent=43 // pred_fallthru
          _
        // Predicated region
        $region49: #{tpu_custom_call.1} parent=43 // pred_check
          %p706 = pneg %p158
        $region50: #{tpu_custom_call.1} parent=43 // pred_check_branch
          %708 = sbr.rel (%p706) target = $region52
        $region51: #{tpu_custom_call.1} parent=43 // pred_region
          %s709 = sand.u32 %s143, 1
          %s710 = scalar_lea.sflag [#allocation5], %s709
          %s711 = sand.u32 %s143, 1
          %s712 = smul.addr %s711, 32
          %s713 = scalar_lea.vmem [#allocation4], %s712
          %714 = dma.done %s710, 512
        $region52: #{tpu_custom_call.1} parent=43 // pred_fallthru
          _
      $region44: #{tpu_custom_call.1} parent=5 // pred_fallthru
        _
    $region6: #{tpu_custom_call.1} parent=1 // loop_footer
      %s21 = sadd.s32 1, %s17
    $region7: #{tpu_custom_call.1} parent=1 // loop_footer_branch
      %16 = sbr.rel target = $region3
    $region8: #{tpu_custom_call.1} parent=1 // loop_exit
      _
    %715 = vsyncpa [#allocation3], 1
    %s716 = scalar_lea.sflag [#allocation3], 1
    %717 = vsyncpa %s716, 1
    %718 = vsyncpa [#allocation5], 1
    %s719 = scalar_lea.sflag [#allocation5], 1
    %720 = vsyncpa %s719, 1

</llo_original>
